<compile_context>
chip_gen: v7x
topology: tpu7x:2x2x1
jax: 0.10.0
libtpu: 0.0.40
codegen_flags: <defaults>
</compile_context>

<pallas_src>
import functools
import math

import jax
import jax.numpy as jnp
from jax.experimental import pallas as pl
from jax.experimental.pallas import tpu as pltpu

F32 = jnp.float32
BF16 = jnp.bfloat16


# --------------------------------------------------------------------------
# Generation-dependent configuration (guarded hardware query).
# --------------------------------------------------------------------------
def _tpu_config():
    vmem_cap = 64 * 1024 * 1024  # conservative default (v7x-like) if query fails
    try:
        info = pltpu.get_tpu_info()
        vmem_cap = int(getattr(info, "vmem_capacity_bytes", vmem_cap))
    except Exception:
        pass
    if vmem_cap >= 96 * 1024 * 1024:      # v5e / v6e: 128 MiB physical VMEM
        return dict(vmem_limit=96 * 1024 * 1024, row_tile=256,
                    pair_ti=16, pair_tj=512, q_tile=256, k_tile=256)
    # v7x-like: 64 MiB physical VMEM
    return dict(vmem_limit=44 * 1024 * 1024, row_tile=256,
                pair_ti=16, pair_tj=256, q_tile=128, k_tile=128)


def _fit_tile(n, target):
    """Largest power-of-two multiple of 128 that divides n and is <= target."""
    best = 128
    d = 128
    t = min(target, n)
    while d <= t:
        if n % d == 0:
            best = d
        d *= 2
    return best


def _pad_rows(x, n_pad, value=0.0):
    n = x.shape[0]
    if n == n_pad:
        return x
    pad = [(0, n_pad - n)] + [(0, 0)] * (x.ndim - 1)
    return jnp.pad(x, pad, constant_values=value)


# --------------------------------------------------------------------------
# Kernel 1: per-atom projections.
#   a    = ref_feat @ Wc
#   al   = relu(a) @ Wcl        am = relu(a) @ Wcm
#   piwp = ref_pos @ Wp         (reused by the pair kernel; linear_p is linear)
# --------------------------------------------------------------------------
def _embed_kernel(feat_ref, pos_ref, wc_ref, wcl_ref, wcm_ref, wp_ref,
                  a_ref, al_ref, am_ref, piwp_ref):
    a = jnp.dot(feat_ref[...], wc_ref[...], preferred_element_type=F32)
    a_ref[...] = a
    ra = jnp.maximum(a, 0.0)
    al_ref[...] = jnp.dot(ra, wcl_ref[...], preferred_element_type=F32)
    am_ref[...] = jnp.dot(ra, wcm_ref[...], preferred_element_type=F32)
    piwp_ref[...] = jnp.dot(pos_ref[...], wp_ref[...], preferred_element_type=F32)


def embed_atoms(feat, pos, wc, wcl, wcm, wp, *, row_tile, vmem_limit):
    n, ref_dim = feat.shape
    c_a = wc.shape[1]
    c_ap = wcl.shape[1]
    tn = _fit_tile(n, row_tile)
    return pl.pallas_call(
        _embed_kernel,
        out_shape=(
            jax.ShapeDtypeStruct((n, c_a), F32),
            jax.ShapeDtypeStruct((n, c_ap), F32),
            jax.ShapeDtypeStruct((n, c_ap), F32),
            jax.ShapeDtypeStruct((n, c_ap), F32),
        ),
        grid=(n // tn,),
        in_specs=[
            pl.BlockSpec((tn, ref_dim), lambda i: (i, 0)),
            pl.BlockSpec((tn, 3), lambda i: (i, 0)),
            pl.BlockSpec(wc.shape, lambda i: (0, 0)),
            pl.BlockSpec(wcl.shape, lambda i: (0, 0)),
            pl.BlockSpec(wcm.shape, lambda i: (0, 0)),
            pl.BlockSpec(wp.shape, lambda i: (0, 0)),
        ],
        out_specs=(
            pl.BlockSpec((tn, c_a), lambda i: (i, 0)),
            pl.BlockSpec((tn, c_ap), lambda i: (i, 0)),
            pl.BlockSpec((tn, c_ap), lambda i: (i, 0)),
            pl.BlockSpec((tn, c_ap), lambda i: (i, 0)),
        ),
        compiler_params=pltpu.CompilerParams(
            dimension_semantics=("parallel",),
            vmem_limit_bytes=vmem_limit),
    )(feat, pos, wc, wcl, wcm, wp)


# --------------------------------------------------------------------------
# Kernel 2: pair embedding (+ FFN residual) and the fused pair bias of every
# transformer block/head.
#   ap[i,j,:] = cl(relu(a))_i + cm(relu(a))_j + (pwi_i - pwj_j)*v + Wd/(1+||d||)*v + Wv*v^2
#   ap += FFN(ap);   bias[i,j,:] = ap[i,j,:] @ Wb_all
# Tile is staged as a [ti*tj, c_ap] slab => FFN / bias are single 2-D matmuls.
# --------------------------------------------------------------------------
def _pair_kernel(pos_i_ref, pos_j_ref, uid_i_ref, uid_j_ref,
                 al_ref, am_ref, pwi_ref, pwj_ref,
                 wd_ref, wv_ref, w1_ref, w2_ref, wb_ref,
                 ap_ref, bias_ref, x_ref):
    ti = pos_i_ref.shape[0]
    tj = pos_j_ref.shape[0]

    pos_j = pos_j_ref[...]          # [tj, 3]
    uid_j = uid_j_ref[...]          # [tj, 1]
    am = am_ref[...]                # [tj, C]
    pwj = pwj_ref[...]              # [tj, C]
    wd = wd_ref[...]                # [1, C]
    wv = wv_ref[...]                # [1, C]

    # Per-i-row construction of the pair slab (safe 2-D broadcasts only),
    # written into the [ti*tj, C] staging buffer (C lives in lanes).
    for i in range(ti):
        pos_i = pos_i_ref[i:i + 1, :]                            # [1, 3]
        d = pos_i - pos_j                                        # [tj, 3]
        dist = jnp.sqrt(d[:, 0:1] * d[:, 0:1] +
                        d[:, 1:2] * d[:, 1:2] +
                        d[:, 2:3] * d[:, 2:3])                   # [tj, 1]
        inv_d = 1.0 / (1.0 + dist)                               # exact reciprocal
        vcol = (uid_j == uid_i_ref[i:i + 1, :]).astype(F32)      # [tj, 1]
        dv = inv_d * vcol
        vsq = vcol * vcol
        p = (pwi_ref[i:i + 1, :] - pwj) * vcol + dv * wd + vsq * wv   # [tj, C]
        x_ref[i * tj:(i + 1) * tj, :] = al_ref[i:i + 1, :] + am + p

    x = x_ref[...]                                               # [ti*tj, C] f32
    # FeedForward (bias-free 2-layer ReLU) — two single large MXU matmuls.
    h = jnp.dot(x.astype(BF16), w1_ref[...].astype(BF16),
                preferred_element_type=F32)
    h = jnp.maximum(h, 0.0)
    ffn = jnp.dot(h.astype(BF16), w2_ref[...].astype(BF16),
                  preferred_element_type=F32)
    ap_f = x + ffn                                               # [ti*tj, C]
    # Fused pair bias of every block & head — ONE matmul on the resident slab.
    bias = jnp.dot(ap_f.astype(BF16), wb_ref[...].astype(BF16),
                   preferred_element_type=F32)                   # [ti*tj, B*H]

    for i in range(ti):
        ap_ref[i] = ap_f[i * tj:(i + 1) * tj, :]                 # user layout [N,N,C]
        bias_ref[i] = bias[i * tj:(i + 1) * tj, :].astype(BF16)


def pair_embed(pos, uid_col, al, am, piwp, wd, wv, w1, w2, wb_all, *,
               ti, tj, vmem_limit):
    n = pos.shape[0]
    C = al.shape[1]
    M = w1.shape[1]
    BH = wb_all.shape[1]
    tj = _fit_tile(n, tj)
    ti = ti if n % ti == 0 else 8
    cost = pl.CostEstimate(
        flops=int(n * n * (4 * C * M + 2 * C * BH) + 12 * n * n * C),
        transcendentals=int(n * n),
        bytes_accessed=int(n * n * (C * 4 + BH * 2 + 8) + n * (3 * C + 8) * 4),
    )
    return pl.pallas_call(
        _pair_kernel,
        out_shape=(
            jax.ShapeDtypeStruct((n, n, C), F32),
            jax.ShapeDtypeStruct((n, n, BH), BF16),
        ),
        grid=(n // ti, n // tj),
        in_specs=[
            pl.BlockSpec((ti, 3), lambda i, j: (i, 0)),      # pos rows (i side)
            pl.BlockSpec((tj, 3), lambda i, j: (j, 0)),      # pos rows (j side)
            pl.BlockSpec((ti, 1), lambda i, j: (i, 0)),      # uid (i side)
            pl.BlockSpec((tj, 1), lambda i, j: (j, 0)),      # uid (j side)
            pl.BlockSpec((ti, C), lambda i, j: (i, 0)),      # cl(relu(a)) rows
            pl.BlockSpec((tj, C), lambda i, j: (j, 0)),      # cm(relu(a)) rows
            pl.BlockSpec((ti, C), lambda i, j: (i, 0)),      # pos@Wp (i side)
            pl.BlockSpec((tj, C), lambda i, j: (j, 0)),      # pos@Wp (j side)
            pl.BlockSpec((1, C), lambda i, j: (0, 0)),       # Wd (lane-major)
            pl.BlockSpec((1, C), lambda i, j: (0, 0)),       # Wv (lane-major)
            pl.BlockSpec(w1.shape, lambda i, j: (0, 0)),     # FFN W1
            pl.BlockSpec(w2.shape, lambda i, j: (0, 0)),     # FFN W2
            pl.BlockSpec(wb_all.shape, lambda i, j: (0, 0)),  # all blocks' Wb
        ],
        out_specs=(
            pl.BlockSpec((ti, tj, C), lambda i, j: (i, j, 0)),
            pl.BlockSpec((ti, tj, BH), lambda i, j: (i, j, 0)),
        ),
        scratch_shapes=[pltpu.VMEM((ti * tj, C), F32)],
        compiler_params=pltpu.CompilerParams(
            dimension_semantics=("parallel", "parallel"),
            vmem_limit_bytes=vmem_limit),
        cost_estimate=cost,
    )(pos, pos, uid_col, uid_col, al, am, piwp, piwp, wd, wv, w1, w2, wb_all)


# --------------------------------------------------------------------------
# Kernel 3: per-block LN + Q/K/V projections, computed once per block
# (hoisted out of the per-query-tile attention kernel), stored head-major.
# --------------------------------------------------------------------------
def _qkv_kernel(a_ref, g_ref, b_ref, wq_ref, wk_ref, wv_ref,
                q_ref, k_ref, v_ref, *, eps):
    a = a_ref[...]
    mu = jnp.mean(a, axis=-1, keepdims=True)
    xc = a - mu
    var = jnp.mean(xc * xc, axis=-1, keepdims=True)
    an = (xc * jax.lax.rsqrt(var + eps) * g_ref[...] + b_ref[...]).astype(BF16)
    n_heads = wq_ref.shape[0]
    for h in range(n_heads):
        q_ref[h] = jnp.dot(an, wq_ref[h].astype(BF16), preferred_element_type=F32)
        k_ref[h] = jnp.dot(an, wk_ref[h].astype(BF16), preferred_element_type=F32)
        v_ref[h] = jnp.dot(an, wv_ref[h].astype(BF16), preferred_element_type=F32)


def qkv_project(a, g1, b1, wq_hm, wk_hm, wv_hm, *, row_tile, eps, vmem_limit):
    n, c_a = a.shape
    n_heads, _, dh = wq_hm.shape
    tn = _fit_tile(n, row_tile)
    kern = functools.partial(_qkv_kernel, eps=eps)
    hspec = pl.BlockSpec((n_heads, tn, dh), lambda i: (0, i, 0))
    wspec = pl.BlockSpec(wq_hm.shape, lambda i: (0, 0, 0))
    return pl.pallas_call(
        kern,
        out_shape=tuple(jax.ShapeDtypeStruct((n_heads, n, dh), F32)
                        for _ in range(3)),
        grid=(n // tn,),
        in_specs=[
            pl.BlockSpec((tn, c_a), lambda i: (i, 0)),
            pl.BlockSpec(g1.shape, lambda i: (0, 0)),
            pl.BlockSpec(b1.shape, lambda i: (0, 0)),
            wspec, wspec, wspec,
        ],
        out_specs=(hspec, hspec, hspec),
        compiler_params=pltpu.CompilerParams(
            dimension_semantics=("parallel",),
            vmem_limit_bytes=vmem_limit),
    )(a, g1, b1, wq_hm, wk_hm, wv_hm)


# --------------------------------------------------------------------------
# Kernel 4: one AtomTransformer block — flash-style attention with
# precomputed pair bias (key-dimension grid axis, online softmax), single
# post-loop output projection, then pre-LN transition, both with residual.
# --------------------------------------------------------------------------
def _attn_kernel(a_ref, q_ref, k_ref, v_ref, bias_ref, mask_ref,
                 wo_ref, g2_ref, b2_ref, wt1_ref, wt2_ref,
                 out_ref, m_sc, l_sc, acc_sc, attn_sc, *, inf, eps):
    n_heads, _, dh = q_ref.shape
    scale = 1.0 / math.sqrt(dh)
    kv = pl.program_id(1)

    @pl.when(kv == 0)
    def _init():
        m_sc[...] = jnp.full(m_sc.shape, -1e30, F32)
        l_sc[...] = jnp.zeros(l_sc.shape, F32)
        acc_sc[...] = jnp.zeros(acc_sc.shape, F32)

    mask = mask_ref[...]                              # [tq, tk]
    neg = (mask - 1.0) * inf

    for h in range(n_heads):
        q = q_ref[h].astype(BF16)                     # [tq, dh]
        k = k_ref[h].astype(BF16)                     # [tk, dh]
        s = jax.lax.dot_general(q, k, (((1,), (1,)), ((), ())),
                                preferred_element_type=F32) * scale
        s = s + bias_ref[h].astype(F32) + neg
        m_prev = m_sc[h]                              # [tq, 1]
        m_new = jnp.maximum(m_prev, jnp.max(s, axis=-1, keepdims=True))
        alpha = jnp.exp(m_prev - m_new)
        p = jnp.exp(s - m_new) * mask                 # exact zeros on masked cols
        l_sc[h] = alpha * l_sc[h] + jnp.sum(p, axis=-1, keepdims=True)
        acc_sc[h] = alpha * acc_sc[h] + jnp.dot(
            p.astype(BF16), v_ref[h].astype(BF16), preferred_element_type=F32)
        m_sc[h] = m_new

    @pl.when(kv == pl.num_programs(1) - 1)
    def _finalize():
        for h in range(n_heads):
            attn_sc[:, h * dh:(h + 1) * dh] = acc_sc[h] * pl.reciprocal(
                l_sc[h] + 1e-9, approx=True)          # masked rows -> 0, no NaN
        attn = attn_sc[...]                           # [tq, c_a]
        proj = jnp.dot(attn.astype(BF16), wo_ref[...].astype(BF16),
                       preferred_element_type=F32)    # single K=c_a matmul
        a1 = a_ref[...] + proj
        mu = jnp.mean(a1, axis=-1, keepdims=True)
        xc = a1 - mu
        var = jnp.mean(xc * xc, axis=-1, keepdims=True)
        a1n = (xc * jax.lax.rsqrt(var + eps) * g2_ref[...]
               + b2_ref[...]).astype(BF16)
        ht = jnp.maximum(jnp.dot(a1n, wt1_ref[...].astype(BF16),
                                 preferred_element_type=F32), 0.0)
        out_ref[...] = a1 + jnp.dot(ht.astype(BF16), wt2_ref[...].astype(BF16),
                                    preferred_element_type=F32)


def attn_block(a, q_hm, k_hm, v_hm, bias_hm, mask, blk, block_idx, *,
               q_tile, k_tile, inf, eps, vmem_limit):
    n, c_a = a.shape
    n_heads, _, dh = q_hm.shape
    tq = _fit_tile(n, q_tile)
    tk = _fit_tile(n, k_tile)
    b = block_idx
    kern = functools.partial(_attn_kernel, inf=inf, eps=eps)
    cost = pl.CostEstimate(
        flops=int(4 * n * n * n_heads * dh + 2 * n * c_a * c_a
                  + 8 * n * c_a * c_a),
        transcendentals=int(n * n * n_heads),
        bytes_accessed=int(n * n * (2 * n_heads + 4)
                           + 3 * n * n_heads * dh * 4 + 8 * n * c_a * 4),
    )
    return pl.pallas_call(
        kern,
        out_shape=jax.ShapeDtypeStruct((n, c_a), F32),
        grid=(n // tq, n // tk),
        in_specs=[
            pl.BlockSpec((tq, c_a), lambda i, k: (i, 0)),              # a rows
            pl.BlockSpec((n_heads, tq, dh), lambda i, k: (0, i, 0)),   # q (head-major)
            pl.BlockSpec((n_heads, tk, dh), lambda i, k: (0, k, 0)),   # k (head-major)
            pl.BlockSpec((n_heads, tk, dh), lambda i, k: (0, k, 0)),   # v (head-major)
            pl.BlockSpec((n_heads, tq, tk), lambda i, k, b=b: (b, i, k)),  # pair bias
            pl.BlockSpec((tq, tk), lambda i, k: (i, k)),               # ap_mask
            pl.BlockSpec(blk["wo"].shape, lambda i, k: (0, 0)),
            pl.BlockSpec(blk["ln2_g"].shape, lambda i, k: (0, 0)),
            pl.BlockSpec(blk["ln2_b"].shape, lambda i, k: (0, 0)),
            pl.BlockSpec(blk["wt1"].shape, lambda i, k: (0, 0)),
            pl.BlockSpec(blk["wt2"].shape, lambda i, k: (0, 0)),
        ],
        out_specs=pl.BlockSpec((tq, c_a), lambda i, k: (i, 0)),
        scratch_shapes=[
            pltpu.VMEM((n_heads, tq, 1), F32),    # m
            pltpu.VMEM((n_heads, tq, 1), F32),    # l
            pltpu.VMEM((n_heads, tq, dh), F32),   # acc
            pltpu.VMEM((tq, c_a), F32),           # concatenated heads
        ],
        compiler_params=pltpu.CompilerParams(
            dimension_semantics=("parallel", "arbitrary"),
            vmem_limit_bytes=vmem_limit),
        cost_estimate=cost,
    )(a, q_hm, k_hm, v_hm, bias_hm, mask,
      blk["wo"], blk["ln2_g"], blk["ln2_b"], blk["wt1"], blk["wt2"])


# --------------------------------------------------------------------------
# Module wrapper with deterministic synthetic parameters.
# --------------------------------------------------------------------------
class AtomEmbedderPallas:
    def __init__(self, ref_dim, c_a, c_ap, inf, eps, no_blocks_atom,
                 n_heads=4, key=None):
        assert c_a % n_heads == 0
        self.inf = float(inf)
        self.eps = float(eps)
        self.n_heads = n_heads
        self.no_blocks = no_blocks_atom
        self.c_a = c_a
        self.c_ap = c_ap
        self.dh = c_a // n_heads
        self.cfg = _tpu_config()
        key = jax.random.PRNGKey(0) if key is None else key

        def w(k, shape, scale=0.1):
            return (scale * jax.random.normal(k, shape)).astype(F32)

        ks = jax.random.split(key, 8 + 7 * no_blocks_atom)
        self.wc = w(ks[0], (ref_dim, c_a))
        self.wp = w(ks[1], (3, c_ap))
        self.wd = w(ks[2], (1, c_ap))                # linear_d weight (lane-major)
        self.wv = w(ks[3], (1, c_ap))                # linear_v weight (lane-major)
        self.wcl = w(ks[4], (c_a, c_ap))
        self.wcm = w(ks[5], (c_a, c_ap))
        # TODO(synk): FeedForward hidden width assumed 4*c_ap (not in reference).
        self.ffn_w1 = w(ks[6], (c_ap, 4 * c_ap))
        self.ffn_w2 = w(ks[7], (4 * c_ap, c_ap))

        dh = self.dh
        self.blocks = []
        wb_cols = []
        for bidx in range(no_blocks_atom):
            kb = ks[8 + 7 * bidx: 8 + 7 * (bidx + 1)]
            wb_cols.append(w(kb[0], (c_ap, n_heads)))   # per-block pair-bias proj

            def head_major(m):
                return jnp.transpose(m.reshape(c_a, n_heads, dh), (1, 0, 2))

            self.blocks.append(dict(
                ln1_g=jnp.ones((1, c_a), F32),
                ln1_b=jnp.zeros((1, c_a), F32),
                wq_hm=head_major(w(kb[1], (c_a, c_a))),
                wk_hm=head_major(w(kb[2], (c_a, c_a))),
                wv_hm=head_major(w(kb[3], (c_a, c_a))),
                wo=w(kb[4], (c_a, c_a)),
                ln2_g=jnp.ones((1, c_a), F32),
                ln2_b=jnp.zeros((1, c_a), F32),
                wt1=w(kb[5], (c_a, 2 * c_a)),
                wt2=w(kb[6], (2 * c_a, c_a)),
            ))
        # Every block's pair-bias projection fused -> ONE matmul in the pair kernel.
        self.wb_all = jnp.concatenate(wb_cols, axis=1)   # [c_ap, B*H]

    def __call__(self, batch):
        cfg = self.cfg
        ref_feat = batch["ref_feat"].astype(F32)
        ref_pos = batch["ref_pos"].astype(F32)
        uid = batch["ref_space_uid"].astype(F32)[:, None]
        ap_mask = batch["ap_mask"].astype(F32)
        n = ref_feat.shape[0]
        n_pad = ((n + 127) // 128) * 128                 # pad, never full-dim tiles

        feat_p = _pad_rows(ref_feat, n_pad)
        pos_p = _pad_rows(ref_pos, n_pad)
        uid_p = _pad_rows(uid, n_pad, value=-1.0)
        mask_p = jnp.pad(ap_mask, ((0, n_pad - n), (0, n_pad - n)))

        # Kernel 1: per-atom projections (row-tiled, megacore-parallel).
        a, al, am, piwp = embed_atoms(
            feat_p, pos_p, self.wc, self.wcl, self.wcm, self.wp,
            row_tile=cfg["row_tile"], vmem_limit=cfg["vmem_limit"])

        # Kernel 2: pair embedding (+FFN residual) and fused pair biases.
        ap, bias_qk = pair_embed(
            pos_p, uid_p, al, am, piwp,
            self.wd, self.wv, self.ffn_w1, self.ffn_w2, self.wb_all,
            ti=cfg["pair_ti"], tj=cfg["pair_tj"], vmem_limit=cfg["vmem_limit"])

        # Small bf16 bias tensor -> head-major [B*H, N, N] for the attention blocks
        # (the big ap tensor needs no transpose: it is emitted in [N, N, c_ap]).
        bias_hm = jnp.transpose(bias_qk, (2, 0, 1))

        # Kernels 3/4: AtomTransformer blocks.
        for bidx, blk in enumerate(self.blocks):
            q_hm, k_hm, v_hm = qkv_project(
                a, blk["ln1_g"], blk["ln1_b"],
                blk["wq_hm"], blk["wk_hm"], blk["wv_hm"],
                row_tile=cfg["row_tile"], eps=self.eps,
                vmem_limit=cfg["vmem_limit"])
            a = attn_block(
                a, q_hm, k_hm, v_hm, bias_hm, mask_p, blk, bidx,
                q_tile=cfg["q_tile"], k_tile=cfg["k_tile"],
                inf=self.inf, eps=self.eps, vmem_limit=cfg["vmem_limit"])

        return a[:n], ap[:n, :n, :]


# --------------------------------------------------------------------------
if __name__ == "__main__":
    N, REF_DIM, C_A, C_AP = 32, 32, 128, 16
    INF, EPS, NO_BLOCKS = 1e9, 1e-5, 2

    root = jax.random.PRNGKey(0)
    k_feat, k_pos, k_uid, k_mask, k_params = jax.random.split(root, 5)

    batch = {
        "ref_feat": jax.random.normal(k_feat, (N, REF_DIM), dtype=jnp.float32),
        "ref_pos": 3.0 * jax.random.normal(k_pos, (N, 3), dtype=jnp.float32),
        "ref_space_uid": jax.random.randint(k_uid, (N,), 0, 4, dtype=jnp.int32),
        "ap_mask": jax.random.bernoulli(k_mask, 0.9, (N, N)).astype(jnp.float32),
    }

    model = AtomEmbedderPallas(REF_DIM, C_A, C_AP, INF, EPS, NO_BLOCKS,
                               n_heads=4, key=k_params)
    a_out, ap_out = model(batch)
    jax.block_until_ready((a_out, ap_out))

    assert a_out.shape == (N, C_A) and ap_out.shape == (N, N, C_AP)
    assert bool(jnp.all(jnp.isfinite(a_out)))
    assert bool(jnp.all(jnp.isfinite(ap_out)))
    print("KERNEL_OK")
</pallas_src>

<mosaic_0001>
module attributes {stable_mosaic.version = 11 : i64} {
  func.func @_embed_kernel(%arg0: i32, %arg1: memref<128x32xf32, #tpu.memory_space<vmem>>, %arg2: memref<128x3xf32, #tpu.memory_space<vmem>>, %arg3: memref<32x128xf32, #tpu.memory_space<vmem>>, %arg4: memref<128x16xf32, #tpu.memory_space<vmem>>, %arg5: memref<128x16xf32, #tpu.memory_space<vmem>>, %arg6: memref<3x16xf32, #tpu.memory_space<vmem>>, %arg7: memref<128x128xf32, #tpu.memory_space<vmem>>, %arg8: memref<128x16xf32, #tpu.memory_space<vmem>>, %arg9: memref<128x16xf32, #tpu.memory_space<vmem>>, %arg10: memref<128x16xf32, #tpu.memory_space<vmem>>) attributes {dimension_semantics = [#tpu.dimension_semantics<parallel>], iteration_bounds = array<i64: 1>, scalar_prefetch = 0 : i64, scratch_operands = 0 : i64, tpu.core_type = #tpu.core_type<tc>, window_params = [{transform_indices = @transform_0, window_bounds = array<i64: 128, 32>}, {transform_indices = @transform_1, window_bounds = array<i64: 128, 3>}, {pipeline_mode = #tpu.pipeline_mode<synchronous>, transform_indices = @transform_2, window_bounds = array<i64: 32, 128>}, {pipeline_mode = #tpu.pipeline_mode<synchronous>, transform_indices = @transform_3, window_bounds = array<i64: 128, 16>}, {pipeline_mode = #tpu.pipeline_mode<synchronous>, transform_indices = @transform_4, window_bounds = array<i64: 128, 16>}, {pipeline_mode = #tpu.pipeline_mode<synchronous>, transform_indices = @transform_5, window_bounds = array<i64: 3, 16>}, {transform_indices = @transform_6, window_bounds = array<i64: 128, 128>}, {transform_indices = @transform_7, window_bounds = array<i64: 128, 16>}, {transform_indices = @transform_8, window_bounds = array<i64: 128, 16>}, {transform_indices = @transform_9, window_bounds = array<i64: 128, 16>}]} {
    %c0 = arith.constant 0 : index
    %c0_0 = arith.constant 0 : index
    %0 = vector.load %arg1[%c0, %c0_0] : memref<128x32xf32, #tpu.memory_space<vmem>>, vector<128x32xf32>
    %c0_1 = arith.constant 0 : index
    %c0_2 = arith.constant 0 : index
    %1 = vector.load %arg3[%c0_1, %c0_2] : memref<32x128xf32, #tpu.memory_space<vmem>>, vector<32x128xf32>
    %cst = arith.constant dense<0.000000e+00> : vector<128x128xf32>
    %2 = tpu.matmul %0, %1, %cst {dimension_numbers = #tpu.dot_dimension_numbers<[1], [0], [0], [1], [0, 0, 1, 1], [], []>} : vector<128x32xf32>, vector<32x128xf32>, vector<128x128xf32> -> vector<128x128xf32>
    %c0_3 = arith.constant 0 : index
    %c0_4 = arith.constant 0 : index
    %3 = vector.load %arg7[%c0_3, %c0_4] : memref<128x128xf32, #tpu.memory_space<vmem>>, vector<128x128xf32>
    tpu.vector_store %arg7[%c0_3, %c0_4], %2 {strides = array<i32>} : memref<128x128xf32, #tpu.memory_space<vmem>>, vector<128x128xf32>,
    %cst_5 = arith.constant 0.000000e+00 : f32
    %4 = vector.broadcast %cst_5 : f32 to vector<128x128xf32>
    %5 = arith.maximumf %2, %4 : vector<128x128xf32>
    %c0_6 = arith.constant 0 : index
    %c0_7 = arith.constant 0 : index
    %6 = vector.load %arg4[%c0_6, %c0_7] : memref<128x16xf32, #tpu.memory_space<vmem>>, vector<128x16xf32>
    %cst_8 = arith.constant dense<0.000000e+00> : vector<128x16xf32>
    %7 = tpu.matmul %5, %6, %cst_8 {dimension_numbers = #tpu.dot_dimension_numbers<[1], [0], [0], [1], [0, 0, 1, 1], [], []>} : vector<128x128xf32>, vector<128x16xf32>, vector<128x16xf32> -> vector<128x16xf32>
    %c0_9 = arith.constant 0 : index
    %c0_10 = arith.constant 0 : index
    %8 = vector.load %arg8[%c0_9, %c0_10] : memref<128x16xf32, #tpu.memory_space<vmem>>, vector<128x16xf32>
    tpu.vector_store %arg8[%c0_9, %c0_10], %7 {strides = array<i32>} : memref<128x16xf32, #tpu.memory_space<vmem>>, vector<128x16xf32>,
    %c0_11 = arith.constant 0 : index
    %c0_12 = arith.constant 0 : index
    %9 = vector.load %arg5[%c0_11, %c0_12] : memref<128x16xf32, #tpu.memory_space<vmem>>, vector<128x16xf32>
    %cst_13 = arith.constant dense<0.000000e+00> : vector<128x16xf32>
    %10 = tpu.matmul %5, %9, %cst_13 {dimension_numbers = #tpu.dot_dimension_numbers<[1], [0], [0], [1], [0, 0, 1, 1], [], []>} : vector<128x128xf32>, vector<128x16xf32>, vector<128x16xf32> -> vector<128x16xf32>
    %c0_14 = arith.constant 0 : index
    %c0_15 = arith.constant 0 : index
    %11 = vector.load %arg9[%c0_14, %c0_15] : memref<128x16xf32, #tpu.memory_space<vmem>>, vector<128x16xf32>
    tpu.vector_store %arg9[%c0_14, %c0_15], %10 {strides = array<i32>} : memref<128x16xf32, #tpu.memory_space<vmem>>, vector<128x16xf32>,
    %c0_16 = arith.constant 0 : index
    %c0_17 = arith.constant 0 : index
    %12 = vector.load %arg2[%c0_16, %c0_17] : memref<128x3xf32, #tpu.memory_space<vmem>>, vector<128x3xf32>
    %c0_18 = arith.constant 0 : index
    %c0_19 = arith.constant 0 : index
    %13 = vector.load %arg6[%c0_18, %c0_19] : memref<3x16xf32, #tpu.memory_space<vmem>>, vector<3x16xf32>
    %cst_20 = arith.constant dense<0.000000e+00> : vector<128x16xf32>
    %14 = tpu.matmul %12, %13, %cst_20 {dimension_numbers = #tpu.dot_dimension_numbers<[1], [0], [0], [1], [0, 0, 1, 1], [], []>} : vector<128x3xf32>, vector<3x16xf32>, vector<128x16xf32> -> vector<128x16xf32>
    %c0_21 = arith.constant 0 : index
    %c0_22 = arith.constant 0 : index
    %15 = vector.load %arg10[%c0_21, %c0_22] : memref<128x16xf32, #tpu.memory_space<vmem>>, vector<128x16xf32>
    tpu.vector_store %arg10[%c0_21, %c0_22], %14 {strides = array<i32>} : memref<128x16xf32, #tpu.memory_space<vmem>>, vector<128x16xf32>,
    return
  }
  func.func @transform_0(%arg0: i32) -> (i32, i32) {
    %c0_i32 = arith.constant 0 : i32
    %c0_i32_0 = arith.constant 0 : i32
    return %arg0, %c0_i32 : i32, i32
  }
  func.func @transform_1(%arg0: i32) -> (i32, i32) {
    %c0_i32 = arith.constant 0 : i32
    %c0_i32_0 = arith.constant 0 : i32
    return %arg0, %c0_i32 : i32, i32
  }
  func.func @transform_2(%arg0: i32) -> (i32, i32) {
    %c0_i32 = arith.constant 0 : i32
    %c0_i32_0 = arith.constant 0 : i32
    %c0_i32_1 = arith.constant 0 : i32
    return %c0_i32, %c0_i32_0 : i32, i32
  }
  func.func @transform_3(%arg0: i32) -> (i32, i32) {
    %c0_i32 = arith.constant 0 : i32
    %c0_i32_0 = arith.constant 0 : i32
    %c0_i32_1 = arith.constant 0 : i32
    return %c0_i32, %c0_i32_0 : i32, i32
  }
  func.func @transform_4(%arg0: i32) -> (i32, i32) {
    %c0_i32 = arith.constant 0 : i32
    %c0_i32_0 = arith.constant 0 : i32
    %c0_i32_1 = arith.constant 0 : i32
    return %c0_i32, %c0_i32_0 : i32, i32
  }
  func.func @transform_5(%arg0: i32) -> (i32, i32) {
    %c0_i32 = arith.constant 0 : i32
    %c0_i32_0 = arith.constant 0 : i32
    %c0_i32_1 = arith.constant 0 : i32
    return %c0_i32, %c0_i32_0 : i32, i32
  }
  func.func @transform_6(%arg0: i32) -> (i32, i32) {
    %c0_i32 = arith.constant 0 : i32
    %c0_i32_0 = arith.constant 0 : i32
    return %arg0, %c0_i32 : i32, i32
  }
  func.func @transform_7(%arg0: i32) -> (i32, i32) {
    %c0_i32 = arith.constant 0 : i32
    %c0_i32_0 = arith.constant 0 : i32
    return %arg0, %c0_i32 : i32, i32
  }
  func.func @transform_8(%arg0: i32) -> (i32, i32) {
    %c0_i32 = arith.constant 0 : i32
    %c0_i32_0 = arith.constant 0 : i32
    return %arg0, %c0_i32 : i32, i32
  }
  func.func @transform_9(%arg0: i32) -> (i32, i32) {
    %c0_i32 = arith.constant 0 : i32
    %c0_i32_0 = arith.constant 0 : i32
    return %arg0, %c0_i32 : i32, i32
  }
}

</mosaic_0001>

<llo_original>
// kernel: tpu_custom_call.1
$region0: #{tpu_custom_call.1}
  #allocation0 [shape = 'u32[]', space=smem, size = 0x4, offset = 0x4, fixed_abs, tag = 'smem constant byte address 0x4 - core index']
  #allocation1 [shape = 'u32[144,128]{1,0:T(1,128)}', space=vmem, size = 0x12000, scoped, tag = 'internal scratch']
  %s0 = inlined_call_operand.vmem [shape: f32[128,32], index: 0, kind: input, shape index: {}]
  %s1 = inlined_call_operand.vmem [shape: f32[128,3], index: 1, kind: input, shape index: {}]
  %s2 = inlined_call_operand.vmem [shape: f32[32,128], index: 2, kind: input, shape index: {}]
  %s3 = inlined_call_operand.vmem [shape: f32[128,16], index: 3, kind: input, shape index: {}]
  %s4 = inlined_call_operand.vmem [shape: f32[128,16], index: 4, kind: input, shape index: {}]
  %s5 = inlined_call_operand.vmem [shape: f32[3,16], index: 5, kind: input, shape index: {}]
  %s6 = inlined_call_operand.hbm [shape: f32[128,128], index: 6, kind: output, shape index: {0}]
  %s7 = inlined_call_operand.vmem [shape: f32[128,16], index: 7, kind: output, shape index: {1}]
  %s8 = inlined_call_operand.vmem [shape: f32[128,16], index: 8, kind: output, shape index: {2}]
  %s9 = inlined_call_operand.vmem [shape: f32[128,16], index: 9, kind: output, shape index: {3}]
  %10 = xla_tuple %s6, %s7, %s8, %s9
  %s11 = sld [smem:[#allocation0]]
  $region58: #{tpu_custom_call.1} parent=0
    _
  %s13 = ssub.s32 1, %s11
  %s14 = scalar_select 0, %s13, %s11
  $region1: #{tpu_custom_call.1} parent=0
    #allocation2 [shape = 'u8[65536]{0}', space=vmem, size = 0x10000, scoped, tag = 'output window, operand 0, single buffered']
    #allocation3 [shape = 's32[1]{0}', space=sflag, size = 0x4, scoped, tag = 'scoped memory for tpu_custom_call.1']
    %15 = vsyncpa [#allocation3], 0
    // Predicated region
    $region2: #{tpu_custom_call.1} parent=1 // pred_check
      _
    $region3: #{tpu_custom_call.1} parent=1 // pred_check_branch
      %17 = sbr.rel (0) target = $region5
    $region4: #{tpu_custom_call.1} parent=1 // pred_region
      _
    $region5: #{tpu_custom_call.1} parent=1 // pred_fallthru
      _
    // Predicated region
    $region6: #{tpu_custom_call.1} parent=1 // pred_check
      _
    $region7: #{tpu_custom_call.1} parent=1 // pred_check_branch
      %19 = sbr.rel (0) target = $region9
    $region8: #{tpu_custom_call.1} parent=1 // pred_region
      _
    $region9: #{tpu_custom_call.1} parent=1 // pred_fallthru
      _
    // Predicated region
    $region10: #{tpu_custom_call.1} parent=1 // pred_check
      _
    $region11: #{tpu_custom_call.1} parent=1 // pred_check_branch
      %21 = sbr.rel (0) target = $region13
    $region12: #{tpu_custom_call.1} parent=1 // pred_region
      _
    $region13: #{tpu_custom_call.1} parent=1 // pred_fallthru
      _
    // Predicated region
    $region14: #{tpu_custom_call.1} parent=1 // pred_check
      _
    $region15: #{tpu_custom_call.1} parent=1 // pred_check_branch
      %23 = sbr.rel (0) target = $region17
    $region16: #{tpu_custom_call.1} parent=1 // pred_region
      _
    $region17: #{tpu_custom_call.1} parent=1 // pred_fallthru
      _
    // Predicated region
    $region18: #{tpu_custom_call.1} parent=1 // pred_check
      _
    $region19: #{tpu_custom_call.1} parent=1 // pred_check_branch
      %25 = sbr.rel (0) target = $region21
    $region20: #{tpu_custom_call.1} parent=1 // pred_region
      _
    $region21: #{tpu_custom_call.1} parent=1 // pred_fallthru
      _
    // Predicated region
    $region22: #{tpu_custom_call.1} parent=1 // pred_check
      _
    $region23: #{tpu_custom_call.1} parent=1 // pred_check_branch
      %27 = sbr.rel (0) target = $region25
    $region24: #{tpu_custom_call.1} parent=1 // pred_region
      _
    $region25: #{tpu_custom_call.1} parent=1 // pred_fallthru
      _
    %v28 = vld [vmem:[%s0] sm:$0xff]
    %v29 = vld [vmem:[%s0 + $0x8] sm:$0xff]
    %v30 = vld [vmem:[%s0 + $0x10] sm:$0xff]
    %v31 = vld [vmem:[%s0 + $0x18] sm:$0xff]
    %v32 = vld [vmem:[%s0 + $0x20] sm:$0xff]
    %v33 = vld [vmem:[%s0 + $0x28] sm:$0xff]
    %v34 = vld [vmem:[%s0 + $0x30] sm:$0xff]
    %v35 = vld [vmem:[%s0 + $0x38] sm:$0xff]
    %v36 = vld [vmem:[%s0 + $0x40] sm:$0xff]
    %v37 = vld [vmem:[%s0 + $0x48] sm:$0xff]
    %v38 = vld [vmem:[%s0 + $0x50] sm:$0xff]
    %v39 = vld [vmem:[%s0 + $0x58] sm:$0xff]
    %v40 = vld [vmem:[%s0 + $0x60] sm:$0xff]
    %v41 = vld [vmem:[%s0 + $0x68] sm:$0xff]
    %v42 = vld [vmem:[%s0 + $0x70] sm:$0xff]
    %v43 = vld [vmem:[%s0 + $0x78] sm:$0xff]
    %v44 = vld [vmem:[%s2] sm:$0xff]
    %v45 = vld [vmem:[%s2 + $0x8] sm:$0xff]
    %v46 = vld [vmem:[%s2 + $0x10] sm:$0xff]
    %v47 = vld [vmem:[%s2 + $0x18] sm:$0xff]
    %vm48 = vcmask 261120
    %v50 = vsel %vm48, %v28, 0
    %v53 = vsel %vm48, %v29, 0
    %v56 = vsel %vm48, %v30, 0
    %v59 = vsel %vm48, %v31, 0
    %v62 = vsel %vm48, %v32, 0
    %v65 = vsel %vm48, %v33, 0
    %v68 = vsel %vm48, %v34, 0
    %v71 = vsel %vm48, %v35, 0
    %v74 = vsel %vm48, %v36, 0
    %v77 = vsel %vm48, %v37, 0
    %v80 = vsel %vm48, %v38, 0
    %v83 = vsel %vm48, %v39, 0
    %v86 = vsel %vm48, %v40, 0
    %v89 = vsel %vm48, %v41, 0
    %v92 = vsel %vm48, %v42, 0
    %v95 = vsel %vm48, %v43, 0
    %97 = vmatprep.subr.mxu0 0.0
    %98 = vmatpush1.msra.mxu0 %v44
    %99 = vmatprep.subr.mxu0 0.0
    %100 = vmatpush1.msra.mxu0 %v45
    %101 = vmatprep.subr.mxu0 0.0
    %102 = vmatpush1.msra.mxu0 %v46
    %103 = vmatprep.subr.mxu0 0.0
    %104 = vmatpush1.msra.mxu0 %v47
    %105 = vmatprep.subr.mxu0 0.0
    %106 = vmatpush1.msra.mxu0 0.0
    %107 = vmatprep.subr.mxu0 0.0
    %108 = vmatpush1.msra.mxu0 0.0
    %109 = vmatprep.subr.mxu0 0.0
    %110 = vmatpush1.msra.mxu0 0.0
    %111 = vmatprep.subr.mxu0 0.0
    %112 = vmatpush1.msra.mxu0 0.0
    %113 = vmatprep.subr.mxu0 0.0
    %114 = vmatpush1.msra.mxu0 0.0
    %115 = vmatprep.subr.mxu0 0.0
    %116 = vmatpush1.msra.mxu0 0.0
    %117 = vmatprep.subr.mxu0 0.0
    %118 = vmatpush1.msra.mxu0 0.0
    %119 = vmatprep.subr.mxu0 0.0
    %120 = vmatpush1.msra.mxu0 0.0
    %121 = vmatprep.subr.mxu0 0.0
    %122 = vmatpush1.msra.mxu0 0.0
    %123 = vmatprep.subr.mxu0 0.0
    %124 = vmatpush1.msra.mxu0 0.0
    %125 = vmatprep.subr.mxu0 0.0
    %126 = vmatpush1.msra.mxu0 0.0
    %127 = vmatprep.subr.mxu0 0.0
    %128 = vmatpush1.msra.mxu0 0.0
    %129 = vmatprep.subr.mxu0 0.0
    %130 = vmatpush1.msra.mxu0 0.0
    %131 = vmatprep.subr.mxu0 0.0
    %132 = vmatpush1.msra.mxu0 0.0
    %133 = vmatprep.subr.mxu0 0.0
    %134 = vmatpush1.msra.mxu0 0.0
    %135 = vmatprep.subr.mxu0 0.0
    %136 = vmatpush1.msra.mxu0 0.0
    %137 = vmatprep.subr.mxu0 0.0
    %138 = vmatpush1.msra.mxu0 0.0
    %139 = vmatprep.subr.mxu0 0.0
    %140 = vmatpush1.msra.mxu0 0.0
    %141 = vmatprep.subr.mxu0 0.0
    %142 = vmatpush1.msra.mxu0 0.0
    %143 = vmatprep.subr.mxu0 0.0
    %144 = vmatpush1.msra.mxu0 0.0
    %145 = vmatprep.subr.mxu0 0.0
    %146 = vmatpush1.msra.mxu0 0.0
    %147 = vmatprep.subr.mxu0 0.0
    %148 = vmatpush1.msra.mxu0 0.0
    %149 = vmatprep.subr.mxu0 0.0
    %150 = vmatpush1.msra.mxu0 0.0
    %151 = vmatprep.subr.mxu0 0.0
    %152 = vmatpush1.msra.mxu0 0.0
    %153 = vmatprep.subr.mxu0 0.0
    %154 = vmatpush1.msra.mxu0 0.0
    %155 = vmatprep.subr.mxu0 0.0
    %156 = vmatpush1.msra.mxu0 0.0
    %157 = vmatprep.subr.mxu0 0.0
    %158 = vmatpush1.msra.mxu0 0.0
    %159 = vmatprep.subr.mxu0 0.0
    %160 = vmatpush1.msra.mxu0 0.0
    %161 = vmatprep.mubr.f32.mxu0 0.0
    %162 = vmatmul.mubr.f32.gmra.mrb[0].mxu0 %v50
    %v163 = vpop.f32.mrb[0].mxu0
    %v164 = vadd.f32 0.0, %v163
    %v165 = vpop.f32.mrb[0].mxu0
    %166 = vmatprep.mubr.f32.mxu0 0.0
    %167 = vmatmul.mubr.f32.gmra.mrb[0].mxu0 %v53
    %v168 = vpop.f32.mrb[0].mxu0
    %v169 = vadd.f32 0.0, %v168
    %v170 = vpop.f32.mrb[0].mxu0
    %171 = vmatprep.mubr.f32.mxu0 0.0
    %172 = vmatmul.mubr.f32.gmra.mrb[0].mxu0 %v56
    %v173 = vpop.f32.mrb[0].mxu0
    %v174 = vadd.f32 0.0, %v173
    %v175 = vpop.f32.mrb[0].mxu0
    %176 = vmatprep.mubr.f32.mxu0 0.0
    %177 = vmatmul.mubr.f32.gmra.mrb[0].mxu0 %v59
    %v178 = vpop.f32.mrb[0].mxu0
    %v179 = vadd.f32 0.0, %v178
    %v180 = vpop.f32.mrb[0].mxu0
    %181 = vmatprep.mubr.f32.mxu0 0.0
    %182 = vmatmul.mubr.f32.gmra.mrb[0].mxu0 %v62
    %v183 = vpop.f32.mrb[0].mxu0
    %v184 = vadd.f32 0.0, %v183
    %v185 = vpop.f32.mrb[0].mxu0
    %186 = vmatprep.mubr.f32.mxu0 0.0
    %187 = vmatmul.mubr.f32.gmra.mrb[0].mxu0 %v65
    %v188 = vpop.f32.mrb[0].mxu0
    %v189 = vadd.f32 0.0, %v188
    %v190 = vpop.f32.mrb[0].mxu0
    %191 = vmatprep.mubr.f32.mxu0 0.0
    %192 = vmatmul.mubr.f32.gmra.mrb[0].mxu0 %v68
    %v193 = vpop.f32.mrb[0].mxu0
    %v194 = vadd.f32 0.0, %v193
    %v195 = vpop.f32.mrb[0].mxu0
    %196 = vmatprep.mubr.f32.mxu0 0.0
    %197 = vmatmul.mubr.f32.gmra.mrb[0].mxu0 %v71
    %v198 = vpop.f32.mrb[0].mxu0
    %v199 = vadd.f32 0.0, %v198
    %v200 = vpop.f32.mrb[0].mxu0
    %201 = vmatprep.mubr.f32.mxu0 0.0
    %202 = vmatmul.mubr.f32.gmra.mrb[0].mxu0 %v74
    %v203 = vpop.f32.mrb[0].mxu0
    %v204 = vadd.f32 0.0, %v203
    %v205 = vpop.f32.mrb[0].mxu0
    %206 = vmatprep.mubr.f32.mxu0 0.0
    %207 = vmatmul.mubr.f32.gmra.mrb[0].mxu0 %v77
    %v208 = vpop.f32.mrb[0].mxu0
    %v209 = vadd.f32 0.0, %v208
    %v210 = vpop.f32.mrb[0].mxu0
    %211 = vmatprep.mubr.f32.mxu0 0.0
    %212 = vmatmul.mubr.f32.gmra.mrb[0].mxu0 %v80
    %v213 = vpop.f32.mrb[0].mxu0
    %v214 = vadd.f32 0.0, %v213
    %v215 = vpop.f32.mrb[0].mxu0
    %216 = vmatprep.mubr.f32.mxu0 0.0
    %217 = vmatmul.mubr.f32.gmra.mrb[0].mxu0 %v83
    %v218 = vpop.f32.mrb[0].mxu0
    %v219 = vadd.f32 0.0, %v218
    %v220 = vpop.f32.mrb[0].mxu0
    %221 = vmatprep.mubr.f32.mxu0 0.0
    %222 = vmatmul.mubr.f32.gmra.mrb[0].mxu0 %v86
    %v223 = vpop.f32.mrb[0].mxu0
    %v224 = vadd.f32 0.0, %v223
    %v225 = vpop.f32.mrb[0].mxu0
    %226 = vmatprep.mubr.f32.mxu0 0.0
    %227 = vmatmul.mubr.f32.gmra.mrb[0].mxu0 %v89
    %v228 = vpop.f32.mrb[0].mxu0
    %v229 = vadd.f32 0.0, %v228
    %v230 = vpop.f32.mrb[0].mxu0
    %231 = vmatprep.mubr.f32.mxu0 0.0
    %232 = vmatmul.mubr.f32.gmra.mrb[0].mxu0 %v92
    %v233 = vpop.f32.mrb[0].mxu0
    %v234 = vadd.f32 0.0, %v233
    %v235 = vpop.f32.mrb[0].mxu0
    %236 = vmatprep.mubr.f32.mxu0 0.0
    %237 = vmatmul.mubr.f32.gmra.mrb[0].mxu0 %v95
    %v238 = vpop.f32.mrb[0].mxu0
    %v239 = vadd.f32 0.0, %v238
    %v240 = vpop.f32.mrb[0].mxu0
    %241 = vdwg.mxu0
    %242 = vst [vmem:[#allocation2] sm:$0xff] %v164
    %243 = vst [vmem:[#allocation2 + $0x8] sm:$0xff] %v169
    %244 = vst [vmem:[#allocation2 + $0x10] sm:$0xff] %v174
    %245 = vst [vmem:[#allocation2 + $0x18] sm:$0xff] %v179
    %246 = vst [vmem:[#allocation2 + $0x20] sm:$0xff] %v184
    %247 = vst [vmem:[#allocation2 + $0x28] sm:$0xff] %v189
    %248 = vst [vmem:[#allocation2 + $0x30] sm:$0xff] %v194
    %249 = vst [vmem:[#allocation2 + $0x38] sm:$0xff] %v199
    %250 = vst [vmem:[#allocation2 + $0x40] sm:$0xff] %v204
    %251 = vst [vmem:[#allocation2 + $0x48] sm:$0xff] %v209
    %252 = vst [vmem:[#allocation2 + $0x50] sm:$0xff] %v214
    %253 = vst [vmem:[#allocation2 + $0x58] sm:$0xff] %v219
    %254 = vst [vmem:[#allocation2 + $0x60] sm:$0xff] %v224
    %255 = vst [vmem:[#allocation2 + $0x68] sm:$0xff] %v229
    %256 = vst [vmem:[#allocation2 + $0x70] sm:$0xff] %v234
    %257 = vst [vmem:[#allocation2 + $0x78] sm:$0xff] %v239
    %v258 = vmax.f32 %v164, 0.0
    %v259 = vmax.f32 %v169, 0.0
    %v260 = vmax.f32 %v174, 0.0
    %v261 = vmax.f32 %v179, 0.0
    %v262 = vmax.f32 %v184, 0.0
    %v263 = vmax.f32 %v189, 0.0
    %v264 = vmax.f32 %v194, 0.0
    %v265 = vmax.f32 %v199, 0.0
    %v266 = vmax.f32 %v204, 0.0
    %v267 = vmax.f32 %v209, 0.0
    %v268 = vmax.f32 %v214, 0.0
    %v269 = vmax.f32 %v219, 0.0
    %v270 = vmax.f32 %v224, 0.0
    %v271 = vmax.f32 %v229, 0.0
    %v272 = vmax.f32 %v234, 0.0
    %v273 = vmax.f32 %v239, 0.0
    %v274 = vld [vmem:[%s3] sm:$0xff]
    %v275 = vld [vmem:[%s3 + $0x8] sm:$0xff]
    %v276 = vld [vmem:[%s3 + $0x10] sm:$0xff]
    %v277 = vld [vmem:[%s3 + $0x18] sm:$0xff]
    %v278 = vld [vmem:[%s3 + $0x20] sm:$0xff]
    %v279 = vld [vmem:[%s3 + $0x28] sm:$0xff]
    %v280 = vld [vmem:[%s3 + $0x30] sm:$0xff]
    %v281 = vld [vmem:[%s3 + $0x38] sm:$0xff]
    %v282 = vld [vmem:[%s3 + $0x40] sm:$0xff]
    %v283 = vld [vmem:[%s3 + $0x48] sm:$0xff]
    %v284 = vld [vmem:[%s3 + $0x50] sm:$0xff]
    %v285 = vld [vmem:[%s3 + $0x58] sm:$0xff]
    %v286 = vld [vmem:[%s3 + $0x60] sm:$0xff]
    %v287 = vld [vmem:[%s3 + $0x68] sm:$0xff]
    %v288 = vld [vmem:[%s3 + $0x70] sm:$0xff]
    %v289 = vld [vmem:[%s3 + $0x78] sm:$0xff]
    %290 = vmatprep.subr.mxu0 0.0
    %291 = vmatpush1.msra.mxu0 %v274
    %292 = vmatprep.subr.mxu0 0.0
    %293 = vmatpush1.msra.mxu0 %v275
    %294 = vmatprep.subr.mxu0 0.0
    %295 = vmatpush1.msra.mxu0 %v276
    %296 = vmatprep.subr.mxu0 0.0
    %297 = vmatpush1.msra.mxu0 %v277
    %298 = vmatprep.subr.mxu0 0.0
    %299 = vmatpush1.msra.mxu0 %v278
    %300 = vmatprep.subr.mxu0 0.0
    %301 = vmatpush1.msra.mxu0 %v279
    %302 = vmatprep.subr.mxu0 0.0
    %303 = vmatpush1.msra.mxu0 %v280
    %304 = vmatprep.subr.mxu0 0.0
    %305 = vmatpush1.msra.mxu0 %v281
    %306 = vmatprep.subr.mxu0 0.0
    %307 = vmatpush1.msra.mxu0 %v282
    %308 = vmatprep.subr.mxu0 0.0
    %309 = vmatpush1.msra.mxu0 %v283
    %310 = vmatprep.subr.mxu0 0.0
    %311 = vmatpush1.msra.mxu0 %v284
    %312 = vmatprep.subr.mxu0 0.0
    %313 = vmatpush1.msra.mxu0 %v285
    %314 = vmatprep.subr.mxu0 0.0
    %315 = vmatpush1.msra.mxu0 %v286
    %316 = vmatprep.subr.mxu0 0.0
    %317 = vmatpush1.msra.mxu0 %v287
    %318 = vmatprep.subr.mxu0 0.0
    %319 = vmatpush1.msra.mxu0 %v288
    %320 = vmatprep.subr.mxu0 0.0
    %321 = vmatpush1.msra.mxu0 %v289
    %322 = vmatprep.subr.mxu0 0.0
    %323 = vmatpush1.msra.mxu0 0.0
    %324 = vmatprep.subr.mxu0 0.0
    %325 = vmatpush1.msra.mxu0 0.0
    %326 = vmatprep.subr.mxu0 0.0
    %327 = vmatpush1.msra.mxu0 0.0
    %328 = vmatprep.subr.mxu0 0.0
    %329 = vmatpush1.msra.mxu0 0.0
    %330 = vmatprep.subr.mxu0 0.0
    %331 = vmatpush1.msra.mxu0 0.0
    %332 = vmatprep.subr.mxu0 0.0
    %333 = vmatpush1.msra.mxu0 0.0
    %334 = vmatprep.subr.mxu0 0.0
    %335 = vmatpush1.msra.mxu0 0.0
    %336 = vmatprep.subr.mxu0 0.0
    %337 = vmatpush1.msra.mxu0 0.0
    %338 = vmatprep.subr.mxu0 0.0
    %339 = vmatpush1.msra.mxu0 0.0
    %340 = vmatprep.subr.mxu0 0.0
    %341 = vmatpush1.msra.mxu0 0.0
    %342 = vmatprep.subr.mxu0 0.0
    %343 = vmatpush1.msra.mxu0 0.0
    %344 = vmatprep.subr.mxu0 0.0
    %345 = vmatpush1.msra.mxu0 0.0
    %346 = vmatprep.subr.mxu0 0.0
    %347 = vmatpush1.msra.mxu0 0.0
    %348 = vmatprep.subr.mxu0 0.0
    %349 = vmatpush1.msra.mxu0 0.0
    %350 = vmatprep.subr.mxu0 0.0
    %351 = vmatpush1.msra.mxu0 0.0
    %352 = vmatprep.subr.mxu0 0.0
    %353 = vmatpush1.msra.mxu0 0.0
    %354 = vmatprep.mubr.f32.mxu0 0.0
    %355 = vmatmul.mubr.f32.gmra.mrb[0].mxu0 %v258
    %v356 = vpop.f32.mrb[0].mxu0
    %v357 = vadd.f32 0.0, %v356
    %v358 = vpop.f32.mrb[0].mxu0
    %359 = vmatprep.mubr.f32.mxu0 0.0
    %360 = vmatmul.mubr.f32.gmra.mrb[0].mxu0 %v259
    %v361 = vpop.f32.mrb[0].mxu0
    %v362 = vadd.f32 0.0, %v361
    %v363 = vpop.f32.mrb[0].mxu0
    %364 = vmatprep.mubr.f32.mxu0 0.0
    %365 = vmatmul.mubr.f32.gmra.mrb[0].mxu0 %v260
    %v366 = vpop.f32.mrb[0].mxu0
    %v367 = vadd.f32 0.0, %v366
    %v368 = vpop.f32.mrb[0].mxu0
    %369 = vmatprep.mubr.f32.mxu0 0.0
    %370 = vmatmul.mubr.f32.gmra.mrb[0].mxu0 %v261
    %v371 = vpop.f32.mrb[0].mxu0
    %v372 = vadd.f32 0.0, %v371
    %v373 = vpop.f32.mrb[0].mxu0
    %374 = vmatprep.mubr.f32.mxu0 0.0
    %375 = vmatmul.mubr.f32.gmra.mrb[0].mxu0 %v262
    %v376 = vpop.f32.mrb[0].mxu0
    %v377 = vadd.f32 0.0, %v376
    %v378 = vpop.f32.mrb[0].mxu0
    %379 = vmatprep.mubr.f32.mxu0 0.0
    %380 = vmatmul.mubr.f32.gmra.mrb[0].mxu0 %v263
    %v381 = vpop.f32.mrb[0].mxu0
    %v382 = vadd.f32 0.0, %v381
    %v383 = vpop.f32.mrb[0].mxu0
    %384 = vmatprep.mubr.f32.mxu0 0.0
    %385 = vmatmul.mubr.f32.gmra.mrb[0].mxu0 %v264
    %v386 = vpop.f32.mrb[0].mxu0
    %v387 = vadd.f32 0.0, %v386
    %v388 = vpop.f32.mrb[0].mxu0
    %389 = vmatprep.mubr.f32.mxu0 0.0
    %390 = vmatmul.mubr.f32.gmra.mrb[0].mxu0 %v265
    %v391 = vpop.f32.mrb[0].mxu0
    %v392 = vadd.f32 0.0, %v391
    %v393 = vpop.f32.mrb[0].mxu0
    %394 = vmatprep.mubr.f32.mxu0 0.0
    %395 = vmatmul.mubr.f32.gmra.mrb[0].mxu0 %v266
    %v396 = vpop.f32.mrb[0].mxu0
    %v397 = vadd.f32 0.0, %v396
    %v398 = vpop.f32.mrb[0].mxu0
    %399 = vmatprep.mubr.f32.mxu0 0.0
    %400 = vmatmul.mubr.f32.gmra.mrb[0].mxu0 %v267
    %v401 = vpop.f32.mrb[0].mxu0
    %v402 = vadd.f32 0.0, %v401
    %v403 = vpop.f32.mrb[0].mxu0
    %404 = vmatprep.mubr.f32.mxu0 0.0
    %405 = vmatmul.mubr.f32.gmra.mrb[0].mxu0 %v268
    %v406 = vpop.f32.mrb[0].mxu0
    %v407 = vadd.f32 0.0, %v406
    %v408 = vpop.f32.mrb[0].mxu0
    %409 = vmatprep.mubr.f32.mxu0 0.0
    %410 = vmatmul.mubr.f32.gmra.mrb[0].mxu0 %v269
    %v411 = vpop.f32.mrb[0].mxu0
    %v412 = vadd.f32 0.0, %v411
    %v413 = vpop.f32.mrb[0].mxu0
    %414 = vmatprep.mubr.f32.mxu0 0.0
    %415 = vmatmul.mubr.f32.gmra.mrb[0].mxu0 %v270
    %v416 = vpop.f32.mrb[0].mxu0
    %v417 = vadd.f32 0.0, %v416
    %v418 = vpop.f32.mrb[0].mxu0
    %419 = vmatprep.mubr.f32.mxu0 0.0
    %420 = vmatmul.mubr.f32.gmra.mrb[0].mxu0 %v271
    %v421 = vpop.f32.mrb[0].mxu0
    %v422 = vadd.f32 0.0, %v421
    %v423 = vpop.f32.mrb[0].mxu0
    %424 = vmatprep.mubr.f32.mxu0 0.0
    %425 = vmatmul.mubr.f32.gmra.mrb[0].mxu0 %v272
    %v426 = vpop.f32.mrb[0].mxu0
    %v427 = vadd.f32 0.0, %v426
    %v428 = vpop.f32.mrb[0].mxu0
    %429 = vmatprep.mubr.f32.mxu0 0.0
    %430 = vmatmul.mubr.f32.gmra.mrb[0].mxu0 %v273
    %v431 = vpop.f32.mrb[0].mxu0
    %v432 = vadd.f32 0.0, %v431
    %v433 = vpop.f32.mrb[0].mxu0
    %434 = vdwg.mxu0
    %vm435 = vcmask 130048
    %436 = vst.msk [vmem:[%s7] sm:$0xff] %vm435, %v357
    %437 = vst.msk [vmem:[%s7 + $0x8] sm:$0xff] %vm435, %v362
    %438 = vst.msk [vmem:[%s7 + $0x10] sm:$0xff] %vm435, %v367
    %439 = vst.msk [vmem:[%s7 + $0x18] sm:$0xff] %vm435, %v372
    %440 = vst.msk [vmem:[%s7 + $0x20] sm:$0xff] %vm435, %v377
    %441 = vst.msk [vmem:[%s7 + $0x28] sm:$0xff] %vm435, %v382
    %442 = vst.msk [vmem:[%s7 + $0x30] sm:$0xff] %vm435, %v387
    %443 = vst.msk [vmem:[%s7 + $0x38] sm:$0xff] %vm435, %v392
    %444 = vst.msk [vmem:[%s7 + $0x40] sm:$0xff] %vm435, %v397
    %445 = vst.msk [vmem:[%s7 + $0x48] sm:$0xff] %vm435, %v402
    %446 = vst.msk [vmem:[%s7 + $0x50] sm:$0xff] %vm435, %v407
    %447 = vst.msk [vmem:[%s7 + $0x58] sm:$0xff] %vm435, %v412
    %448 = vst.msk [vmem:[%s7 + $0x60] sm:$0xff] %vm435, %v417
    %449 = vst.msk [vmem:[%s7 + $0x68] sm:$0xff] %vm435, %v422
    %450 = vst.msk [vmem:[%s7 + $0x70] sm:$0xff] %vm435, %v427
    %451 = vst.msk [vmem:[%s7 + $0x78] sm:$0xff] %vm435, %v432
    %v452 = vld [vmem:[%s4] sm:$0xff]
    %v453 = vld [vmem:[%s4 + $0x8] sm:$0xff]
    %v454 = vld [vmem:[%s4 + $0x10] sm:$0xff]
    %v455 = vld [vmem:[%s4 + $0x18] sm:$0xff]
    %v456 = vld [vmem:[%s4 + $0x20] sm:$0xff]
    %v457 = vld [vmem:[%s4 + $0x28] sm:$0xff]
    %v458 = vld [vmem:[%s4 + $0x30] sm:$0xff]
    %v459 = vld [vmem:[%s4 + $0x38] sm:$0xff]
    %v460 = vld [vmem:[%s4 + $0x40] sm:$0xff]
    %v461 = vld [vmem:[%s4 + $0x48] sm:$0xff]
    %v462 = vld [vmem:[%s4 + $0x50] sm:$0xff]
    %v463 = vld [vmem:[%s4 + $0x58] sm:$0xff]
    %v464 = vld [vmem:[%s4 + $0x60] sm:$0xff]
    %v465 = vld [vmem:[%s4 + $0x68] sm:$0xff]
    %v466 = vld [vmem:[%s4 + $0x70] sm:$0xff]
    %v467 = vld [vmem:[%s4 + $0x78] sm:$0xff]
    %468 = vmatprep.subr.mxu0 0.0
    %469 = vmatpush1.msra.mxu0 %v452
    %470 = vmatprep.subr.mxu0 0.0
    %471 = vmatpush1.msra.mxu0 %v453
    %472 = vmatprep.subr.mxu0 0.0
    %473 = vmatpush1.msra.mxu0 %v454
    %474 = vmatprep.subr.mxu0 0.0
    %475 = vmatpush1.msra.mxu0 %v455
    %476 = vmatprep.subr.mxu0 0.0
    %477 = vmatpush1.msra.mxu0 %v456
    %478 = vmatprep.subr.mxu0 0.0
    %479 = vmatpush1.msra.mxu0 %v457
    %480 = vmatprep.subr.mxu0 0.0
    %481 = vmatpush1.msra.mxu0 %v458
    %482 = vmatprep.subr.mxu0 0.0
    %483 = vmatpush1.msra.mxu0 %v459
    %484 = vmatprep.subr.mxu0 0.0
    %485 = vmatpush1.msra.mxu0 %v460
    %486 = vmatprep.subr.mxu0 0.0
    %487 = vmatpush1.msra.mxu0 %v461
    %488 = vmatprep.subr.mxu0 0.0
    %489 = vmatpush1.msra.mxu0 %v462
    %490 = vmatprep.subr.mxu0 0.0
    %491 = vmatpush1.msra.mxu0 %v463
    %492 = vmatprep.subr.mxu0 0.0
    %493 = vmatpush1.msra.mxu0 %v464
    %494 = vmatprep.subr.mxu0 0.0
    %495 = vmatpush1.msra.mxu0 %v465
    %496 = vmatprep.subr.mxu0 0.0
    %497 = vmatpush1.msra.mxu0 %v466
    %498 = vmatprep.subr.mxu0 0.0
    %499 = vmatpush1.msra.mxu0 %v467
    %500 = vmatprep.subr.mxu0 0.0
    %501 = vmatpush1.msra.mxu0 0.0
    %502 = vmatprep.subr.mxu0 0.0
    %503 = vmatpush1.msra.mxu0 0.0
    %504 = vmatprep.subr.mxu0 0.0
    %505 = vmatpush1.msra.mxu0 0.0
    %506 = vmatprep.subr.mxu0 0.0
    %507 = vmatpush1.msra.mxu0 0.0
    %508 = vmatprep.subr.mxu0 0.0
    %509 = vmatpush1.msra.mxu0 0.0
    %510 = vmatprep.subr.mxu0 0.0
    %511 = vmatpush1.msra.mxu0 0.0
    %512 = vmatprep.subr.mxu0 0.0
    %513 = vmatpush1.msra.mxu0 0.0
    %514 = vmatprep.subr.mxu0 0.0
    %515 = vmatpush1.msra.mxu0 0.0
    %516 = vmatprep.subr.mxu0 0.0
    %517 = vmatpush1.msra.mxu0 0.0
    %518 = vmatprep.subr.mxu0 0.0
    %519 = vmatpush1.msra.mxu0 0.0
    %520 = vmatprep.subr.mxu0 0.0
    %521 = vmatpush1.msra.mxu0 0.0
    %522 = vmatprep.subr.mxu0 0.0
    %523 = vmatpush1.msra.mxu0 0.0
    %524 = vmatprep.subr.mxu0 0.0
    %525 = vmatpush1.msra.mxu0 0.0
    %526 = vmatprep.subr.mxu0 0.0
    %527 = vmatpush1.msra.mxu0 0.0
    %528 = vmatprep.subr.mxu0 0.0
    %529 = vmatpush1.msra.mxu0 0.0
    %530 = vmatprep.subr.mxu0 0.0
    %531 = vmatpush1.msra.mxu0 0.0
    %532 = vmatprep.mubr.f32.mxu0 0.0
    %533 = vmatmul.mubr.f32.gmra.mrb[0].mxu0 %v258
    %v534 = vpop.f32.mrb[0].mxu0
    %v535 = vadd.f32 0.0, %v534
    %v536 = vpop.f32.mrb[0].mxu0
    %537 = vmatprep.mubr.f32.mxu0 0.0
    %538 = vmatmul.mubr.f32.gmra.mrb[0].mxu0 %v259
    %v539 = vpop.f32.mrb[0].mxu0
    %v540 = vadd.f32 0.0, %v539
    %v541 = vpop.f32.mrb[0].mxu0
    %542 = vmatprep.mubr.f32.mxu0 0.0
    %543 = vmatmul.mubr.f32.gmra.mrb[0].mxu0 %v260
    %v544 = vpop.f32.mrb[0].mxu0
    %v545 = vadd.f32 0.0, %v544
    %v546 = vpop.f32.mrb[0].mxu0
    %547 = vmatprep.mubr.f32.mxu0 0.0
    %548 = vmatmul.mubr.f32.gmra.mrb[0].mxu0 %v261
    %v549 = vpop.f32.mrb[0].mxu0
    %v550 = vadd.f32 0.0, %v549
    %v551 = vpop.f32.mrb[0].mxu0
    %552 = vmatprep.mubr.f32.mxu0 0.0
    %553 = vmatmul.mubr.f32.gmra.mrb[0].mxu0 %v262
    %v554 = vpop.f32.mrb[0].mxu0
    %v555 = vadd.f32 0.0, %v554
    %v556 = vpop.f32.mrb[0].mxu0
    %557 = vmatprep.mubr.f32.mxu0 0.0
    %558 = vmatmul.mubr.f32.gmra.mrb[0].mxu0 %v263
    %v559 = vpop.f32.mrb[0].mxu0
    %v560 = vadd.f32 0.0, %v559
    %v561 = vpop.f32.mrb[0].mxu0
    %562 = vmatprep.mubr.f32.mxu0 0.0
    %563 = vmatmul.mubr.f32.gmra.mrb[0].mxu0 %v264
    %v564 = vpop.f32.mrb[0].mxu0
    %v565 = vadd.f32 0.0, %v564
    %v566 = vpop.f32.mrb[0].mxu0
    %567 = vmatprep.mubr.f32.mxu0 0.0
    %568 = vmatmul.mubr.f32.gmra.mrb[0].mxu0 %v265
    %v569 = vpop.f32.mrb[0].mxu0
    %v570 = vadd.f32 0.0, %v569
    %v571 = vpop.f32.mrb[0].mxu0
    %572 = vmatprep.mubr.f32.mxu0 0.0
    %573 = vmatmul.mubr.f32.gmra.mrb[0].mxu0 %v266
    %v574 = vpop.f32.mrb[0].mxu0
    %v575 = vadd.f32 0.0, %v574
    %v576 = vpop.f32.mrb[0].mxu0
    %577 = vmatprep.mubr.f32.mxu0 0.0
    %578 = vmatmul.mubr.f32.gmra.mrb[0].mxu0 %v267
    %v579 = vpop.f32.mrb[0].mxu0
    %v580 = vadd.f32 0.0, %v579
    %v581 = vpop.f32.mrb[0].mxu0
    %582 = vmatprep.mubr.f32.mxu0 0.0
    %583 = vmatmul.mubr.f32.gmra.mrb[0].mxu0 %v268
    %v584 = vpop.f32.mrb[0].mxu0
    %v585 = vadd.f32 0.0, %v584
    %v586 = vpop.f32.mrb[0].mxu0
    %587 = vmatprep.mubr.f32.mxu0 0.0
    %588 = vmatmul.mubr.f32.gmra.mrb[0].mxu0 %v269
    %v589 = vpop.f32.mrb[0].mxu0
    %v590 = vadd.f32 0.0, %v589
    %v591 = vpop.f32.mrb[0].mxu0
    %592 = vmatprep.mubr.f32.mxu0 0.0
    %593 = vmatmul.mubr.f32.gmra.mrb[0].mxu0 %v270
    %v594 = vpop.f32.mrb[0].mxu0
    %v595 = vadd.f32 0.0, %v594
    %v596 = vpop.f32.mrb[0].mxu0
    %597 = vmatprep.mubr.f32.mxu0 0.0
    %598 = vmatmul.mubr.f32.gmra.mrb[0].mxu0 %v271
    %v599 = vpop.f32.mrb[0].mxu0
    %v600 = vadd.f32 0.0, %v599
    %v601 = vpop.f32.mrb[0].mxu0
    %602 = vmatprep.mubr.f32.mxu0 0.0
    %603 = vmatmul.mubr.f32.gmra.mrb[0].mxu0 %v272
    %v604 = vpop.f32.mrb[0].mxu0
    %v605 = vadd.f32 0.0, %v604
    %v606 = vpop.f32.mrb[0].mxu0
    %607 = vmatprep.mubr.f32.mxu0 0.0
    %608 = vmatmul.mubr.f32.gmra.mrb[0].mxu0 %v273
    %v609 = vpop.f32.mrb[0].mxu0
    %v610 = vadd.f32 0.0, %v609
    %v611 = vpop.f32.mrb[0].mxu0
    %612 = vdwg.mxu0
    %613 = vst.msk [vmem:[%s8] sm:$0xff] %vm435, %v535
    %614 = vst.msk [vmem:[%s8 + $0x8] sm:$0xff] %vm435, %v540
    %615 = vst.msk [vmem:[%s8 + $0x10] sm:$0xff] %vm435, %v545
    %616 = vst.msk [vmem:[%s8 + $0x18] sm:$0xff] %vm435, %v550
    %617 = vst.msk [vmem:[%s8 + $0x20] sm:$0xff] %vm435, %v555
    %618 = vst.msk [vmem:[%s8 + $0x28] sm:$0xff] %vm435, %v560
    %619 = vst.msk [vmem:[%s8 + $0x30] sm:$0xff] %vm435, %v565
    %620 = vst.msk [vmem:[%s8 + $0x38] sm:$0xff] %vm435, %v570
    %621 = vst.msk [vmem:[%s8 + $0x40] sm:$0xff] %vm435, %v575
    %622 = vst.msk [vmem:[%s8 + $0x48] sm:$0xff] %vm435, %v580
    %623 = vst.msk [vmem:[%s8 + $0x50] sm:$0xff] %vm435, %v585
    %624 = vst.msk [vmem:[%s8 + $0x58] sm:$0xff] %vm435, %v590
    %625 = vst.msk [vmem:[%s8 + $0x60] sm:$0xff] %vm435, %v595
    %626 = vst.msk [vmem:[%s8 + $0x68] sm:$0xff] %vm435, %v600
    %627 = vst.msk [vmem:[%s8 + $0x70] sm:$0xff] %vm435, %v605
    %628 = vst.msk [vmem:[%s8 + $0x78] sm:$0xff] %vm435, %v610
    %v629 = vld [vmem:[%s1] sm:$0xff]
    %v630 = vld [vmem:[%s1 + $0x8] sm:$0xff]
    %v631 = vld [vmem:[%s1 + $0x10] sm:$0xff]
    %v632 = vld [vmem:[%s1 + $0x18] sm:$0xff]
    %v633 = vld [vmem:[%s1 + $0x20] sm:$0xff]
    %v634 = vld [vmem:[%s1 + $0x28] sm:$0xff]
    %v635 = vld [vmem:[%s1 + $0x30] sm:$0xff]
    %v636 = vld [vmem:[%s1 + $0x38] sm:$0xff]
    %v637 = vld [vmem:[%s1 + $0x40] sm:$0xff]
    %v638 = vld [vmem:[%s1 + $0x48] sm:$0xff]
    %v639 = vld [vmem:[%s1 + $0x50] sm:$0xff]
    %v640 = vld [vmem:[%s1 + $0x58] sm:$0xff]
    %v641 = vld [vmem:[%s1 + $0x60] sm:$0xff]
    %v642 = vld [vmem:[%s1 + $0x68] sm:$0xff]
    %v643 = vld [vmem:[%s1 + $0x70] sm:$0xff]
    %v644 = vld [vmem:[%s1 + $0x78] sm:$0xff]
    %v645 = vld [vmem:[%s5] sm:$0x7]
    %vm646 = vcmask 23552
    %v648 = vsel %vm646, %v629, 0
    %v651 = vsel %vm646, %v630, 0
    %v654 = vsel %vm646, %v631, 0
    %v657 = vsel %vm646, %v632, 0
    %v660 = vsel %vm646, %v633, 0
    %v663 = vsel %vm646, %v634, 0
    %v666 = vsel %vm646, %v635, 0
    %v669 = vsel %vm646, %v636, 0
    %v672 = vsel %vm646, %v637, 0
    %v675 = vsel %vm646, %v638, 0
    %v678 = vsel %vm646, %v639, 0
    %v681 = vsel %vm646, %v640, 0
    %v684 = vsel %vm646, %v641, 0
    %v687 = vsel %vm646, %v642, 0
    %v690 = vsel %vm646, %v643, 0
    %v693 = vsel %vm646, %v644, 0
    %vm695 = vcmask 1042432
    %v697 = vsel %vm695, %v645, 0
    %699 = vmatprep.subr.mxu0 0.0
    %700 = vmatpush1.msra.mxu0 %v697
    %701 = vmatprep.subr.mxu0 0.0
    %702 = vmatpush1.msra.mxu0 0.0
    %703 = vmatprep.subr.mxu0 0.0
    %704 = vmatpush1.msra.mxu0 0.0
    %705 = vmatprep.subr.mxu0 0.0
    %706 = vmatpush1.msra.mxu0 0.0
    %707 = vmatprep.subr.mxu0 0.0
    %708 = vmatpush1.msra.mxu0 0.0
    %709 = vmatprep.subr.mxu0 0.0
    %710 = vmatpush1.msra.mxu0 0.0
    %711 = vmatprep.subr.mxu0 0.0
    %712 = vmatpush1.msra.mxu0 0.0
    %713 = vmatprep.subr.mxu0 0.0
    %714 = vmatpush1.msra.mxu0 0.0
    %715 = vmatprep.subr.mxu0 0.0
    %716 = vmatpush1.msra.mxu0 0.0
    %717 = vmatprep.subr.mxu0 0.0
    %718 = vmatpush1.msra.mxu0 0.0
    %719 = vmatprep.subr.mxu0 0.0
    %720 = vmatpush1.msra.mxu0 0.0
    %721 = vmatprep.subr.mxu0 0.0
    %722 = vmatpush1.msra.mxu0 0.0
    %723 = vmatprep.subr.mxu0 0.0
    %724 = vmatpush1.msra.mxu0 0.0
    %725 = vmatprep.subr.mxu0 0.0
    %726 = vmatpush1.msra.mxu0 0.0
    %727 = vmatprep.subr.mxu0 0.0
    %728 = vmatpush1.msra.mxu0 0.0
    %729 = vmatprep.subr.mxu0 0.0
    %730 = vmatpush1.msra.mxu0 0.0
    %731 = vmatprep.subr.mxu0 0.0
    %732 = vmatpush1.msra.mxu0 0.0
    %733 = vmatprep.subr.mxu0 0.0
    %734 = vmatpush1.msra.mxu0 0.0
    %735 = vmatprep.subr.mxu0 0.0
    %736 = vmatpush1.msra.mxu0 0.0
    %737 = vmatprep.subr.mxu0 0.0
    %738 = vmatpush1.msra.mxu0 0.0
    %739 = vmatprep.subr.mxu0 0.0
    %740 = vmatpush1.msra.mxu0 0.0
    %741 = vmatprep.subr.mxu0 0.0
    %742 = vmatpush1.msra.mxu0 0.0
    %743 = vmatprep.subr.mxu0 0.0
    %744 = vmatpush1.msra.mxu0 0.0
    %745 = vmatprep.subr.mxu0 0.0
    %746 = vmatpush1.msra.mxu0 0.0
    %747 = vmatprep.subr.mxu0 0.0
    %748 = vmatpush1.msra.mxu0 0.0
    %749 = vmatprep.subr.mxu0 0.0
    %750 = vmatpush1.msra.mxu0 0.0
    %751 = vmatprep.subr.mxu0 0.0
    %752 = vmatpush1.msra.mxu0 0.0
    %753 = vmatprep.subr.mxu0 0.0
    %754 = vmatpush1.msra.mxu0 0.0
    %755 = vmatprep.subr.mxu0 0.0
    %756 = vmatpush1.msra.mxu0 0.0
    %757 = vmatprep.subr.mxu0 0.0
    %758 = vmatpush1.msra.mxu0 0.0
    %759 = vmatprep.subr.mxu0 0.0
    %760 = vmatpush1.msra.mxu0 0.0
    %761 = vmatprep.subr.mxu0 0.0
    %762 = vmatpush1.msra.mxu0 0.0
    %763 = vmatprep.mubr.f32.mxu0 0.0
    %764 = vmatmul.mubr.f32.gmra.mrb[0].mxu0 %v648
    %v765 = vpop.f32.mrb[0].mxu0
    %v766 = vadd.f32 0.0, %v765
    %v767 = vpop.f32.mrb[0].mxu0
    %768 = vmatprep.mubr.f32.mxu0 0.0
    %769 = vmatmul.mubr.f32.gmra.mrb[0].mxu0 %v651
    %v770 = vpop.f32.mrb[0].mxu0
    %v771 = vadd.f32 0.0, %v770
    %v772 = vpop.f32.mrb[0].mxu0
    %773 = vmatprep.mubr.f32.mxu0 0.0
    %774 = vmatmul.mubr.f32.gmra.mrb[0].mxu0 %v654
    %v775 = vpop.f32.mrb[0].mxu0
    %v776 = vadd.f32 0.0, %v775
    %v777 = vpop.f32.mrb[0].mxu0
    %778 = vmatprep.mubr.f32.mxu0 0.0
    %779 = vmatmul.mubr.f32.gmra.mrb[0].mxu0 %v657
    %v780 = vpop.f32.mrb[0].mxu0
    %v781 = vadd.f32 0.0, %v780
    %v782 = vpop.f32.mrb[0].mxu0
    %783 = vmatprep.mubr.f32.mxu0 0.0
    %784 = vmatmul.mubr.f32.gmra.mrb[0].mxu0 %v660
    %v785 = vpop.f32.mrb[0].mxu0
    %v786 = vadd.f32 0.0, %v785
    %v787 = vpop.f32.mrb[0].mxu0
    %788 = vmatprep.mubr.f32.mxu0 0.0
    %789 = vmatmul.mubr.f32.gmra.mrb[0].mxu0 %v663
    %v790 = vpop.f32.mrb[0].mxu0
    %v791 = vadd.f32 0.0, %v790
    %v792 = vpop.f32.mrb[0].mxu0
    %793 = vmatprep.mubr.f32.mxu0 0.0
    %794 = vmatmul.mubr.f32.gmra.mrb[0].mxu0 %v666
    %v795 = vpop.f32.mrb[0].mxu0
    %v796 = vadd.f32 0.0, %v795
    %v797 = vpop.f32.mrb[0].mxu0
    %798 = vmatprep.mubr.f32.mxu0 0.0
    %799 = vmatmul.mubr.f32.gmra.mrb[0].mxu0 %v669
    %v800 = vpop.f32.mrb[0].mxu0
    %v801 = vadd.f32 0.0, %v800
    %v802 = vpop.f32.mrb[0].mxu0
    %803 = vmatprep.mubr.f32.mxu0 0.0
    %804 = vmatmul.mubr.f32.gmra.mrb[0].mxu0 %v672
    %v805 = vpop.f32.mrb[0].mxu0
    %v806 = vadd.f32 0.0, %v805
    %v807 = vpop.f32.mrb[0].mxu0
    %808 = vmatprep.mubr.f32.mxu0 0.0
    %809 = vmatmul.mubr.f32.gmra.mrb[0].mxu0 %v675
    %v810 = vpop.f32.mrb[0].mxu0
    %v811 = vadd.f32 0.0, %v810
    %v812 = vpop.f32.mrb[0].mxu0
    %813 = vmatprep.mubr.f32.mxu0 0.0
    %814 = vmatmul.mubr.f32.gmra.mrb[0].mxu0 %v678
    %v815 = vpop.f32.mrb[0].mxu0
    %v816 = vadd.f32 0.0, %v815
    %v817 = vpop.f32.mrb[0].mxu0
    %818 = vmatprep.mubr.f32.mxu0 0.0
    %819 = vmatmul.mubr.f32.gmra.mrb[0].mxu0 %v681
    %v820 = vpop.f32.mrb[0].mxu0
    %v821 = vadd.f32 0.0, %v820
    %v822 = vpop.f32.mrb[0].mxu0
    %823 = vmatprep.mubr.f32.mxu0 0.0
    %824 = vmatmul.mubr.f32.gmra.mrb[0].mxu0 %v684
    %v825 = vpop.f32.mrb[0].mxu0
    %v826 = vadd.f32 0.0, %v825
    %v827 = vpop.f32.mrb[0].mxu0
    %828 = vmatprep.mubr.f32.mxu0 0.0
    %829 = vmatmul.mubr.f32.gmra.mrb[0].mxu0 %v687
    %v830 = vpop.f32.mrb[0].mxu0
    %v831 = vadd.f32 0.0, %v830
    %v832 = vpop.f32.mrb[0].mxu0
    %833 = vmatprep.mubr.f32.mxu0 0.0
    %834 = vmatmul.mubr.f32.gmra.mrb[0].mxu0 %v690
    %v835 = vpop.f32.mrb[0].mxu0
    %v836 = vadd.f32 0.0, %v835
    %v837 = vpop.f32.mrb[0].mxu0
    %838 = vmatprep.mubr.f32.mxu0 0.0
    %839 = vmatmul.mubr.f32.gmra.mrb[0].mxu0 %v693
    %v840 = vpop.f32.mrb[0].mxu0
    %v841 = vadd.f32 0.0, %v840
    %v842 = vpop.f32.mrb[0].mxu0
    %843 = vdwg.mxu0
    %844 = vst.msk [vmem:[%s9] sm:$0xff] %vm435, %v766
    %845 = vst.msk [vmem:[%s9 + $0x8] sm:$0xff] %vm435, %v771
    %846 = vst.msk [vmem:[%s9 + $0x10] sm:$0xff] %vm435, %v776
    %847 = vst.msk [vmem:[%s9 + $0x18] sm:$0xff] %vm435, %v781
    %848 = vst.msk [vmem:[%s9 + $0x20] sm:$0xff] %vm435, %v786
    %849 = vst.msk [vmem:[%s9 + $0x28] sm:$0xff] %vm435, %v791
    %850 = vst.msk [vmem:[%s9 + $0x30] sm:$0xff] %vm435, %v796
    %851 = vst.msk [vmem:[%s9 + $0x38] sm:$0xff] %vm435, %v801
    %852 = vst.msk [vmem:[%s9 + $0x40] sm:$0xff] %vm435, %v806
    %853 = vst.msk [vmem:[%s9 + $0x48] sm:$0xff] %vm435, %v811
    %854 = vst.msk [vmem:[%s9 + $0x50] sm:$0xff] %vm435, %v816
    %855 = vst.msk [vmem:[%s9 + $0x58] sm:$0xff] %vm435, %v821
    %856 = vst.msk [vmem:[%s9 + $0x60] sm:$0xff] %vm435, %v826
    %857 = vst.msk [vmem:[%s9 + $0x68] sm:$0xff] %vm435, %v831
    %858 = vst.msk [vmem:[%s9 + $0x70] sm:$0xff] %vm435, %v836
    %859 = vst.msk [vmem:[%s9 + $0x78] sm:$0xff] %vm435, %v841
    // Predicated region
    $region26: #{tpu_custom_call.1} parent=1 // pred_check
      _
    $region27: #{tpu_custom_call.1} parent=1 // pred_check_branch
      %861 = sbr.rel (0) target = $region29
    $region28: #{tpu_custom_call.1} parent=1 // pred_region
      %s863 = ssub.s32 2048, 2048
      %864 = vsyncadd [#allocation3], %s863
      %s865 = sshll.u32 [#allocation2], 4
      %s866 = int_to_ptr.vmem [resolvable:$true] %s865
      %871 = dma.vmem_to_hbm [thread:$0]  %s866, 2048, %s6, [#allocation3], 128, 128, 8
    $region29: #{tpu_custom_call.1} parent=1 // pred_fallthru
      _
    // Predicated region
    $region30: #{tpu_custom_call.1} parent=1 // pred_check
      _
    $region31: #{tpu_custom_call.1} parent=1 // pred_check_branch
      %873 = sbr.rel (0) target = $region33
    $region32: #{tpu_custom_call.1} parent=1 // pred_region
      _
    $region33: #{tpu_custom_call.1} parent=1 // pred_fallthru
      _
    // Predicated region
    $region34: #{tpu_custom_call.1} parent=1 // pred_check
      _
    $region35: #{tpu_custom_call.1} parent=1 // pred_check_branch
      %875 = sbr.rel (0) target = $region37
    $region36: #{tpu_custom_call.1} parent=1 // pred_region
      _
    $region37: #{tpu_custom_call.1} parent=1 // pred_fallthru
      _
    // Predicated region
    $region38: #{tpu_custom_call.1} parent=1 // pred_check
      _
    $region39: #{tpu_custom_call.1} parent=1 // pred_check_branch
      %877 = sbr.rel (0) target = $region41
    $region40: #{tpu_custom_call.1} parent=1 // pred_region
      _
    $region41: #{tpu_custom_call.1} parent=1 // pred_fallthru
      _
    // Predicated region
    $region42: #{tpu_custom_call.1} parent=1 // pred_check
      _
    $region43: #{tpu_custom_call.1} parent=1 // pred_check_branch
      %879 = sbr.rel (0) target = $region45
    $region44: #{tpu_custom_call.1} parent=1 // pred_region
      %880 = dma.done [#allocation3], 2048
    $region45: #{tpu_custom_call.1} parent=1 // pred_fallthru
      _
    // Predicated region
    $region46: #{tpu_custom_call.1} parent=1 // pred_check
      _
    $region47: #{tpu_custom_call.1} parent=1 // pred_check_branch
      %882 = sbr.rel (0) target = $region49
    $region48: #{tpu_custom_call.1} parent=1 // pred_region
      _
    $region49: #{tpu_custom_call.1} parent=1 // pred_fallthru
      _
    // Predicated region
    $region50: #{tpu_custom_call.1} parent=1 // pred_check
      _
    $region51: #{tpu_custom_call.1} parent=1 // pred_check_branch
      %884 = sbr.rel (0) target = $region53
    $region52: #{tpu_custom_call.1} parent=1 // pred_region
      _
    $region53: #{tpu_custom_call.1} parent=1 // pred_fallthru
      _
    // Predicated region
    $region54: #{tpu_custom_call.1} parent=1 // pred_check
      _
    $region55: #{tpu_custom_call.1} parent=1 // pred_check_branch
      %886 = sbr.rel (0) target = $region57
    $region56: #{tpu_custom_call.1} parent=1 // pred_region
      _
    $region57: #{tpu_custom_call.1} parent=1 // pred_fallthru
      _
    %887 = vsyncpa [#allocation3], 1

</llo_original>
